<compile_context>
chip_gen: v7x
topology: tpu7x:2x2x1
jax: 0.10.0
libtpu: 0.0.40
codegen_flags: <defaults>
</compile_context>

<pallas_src>
import jax
import jax.numpy as jnp
from jax.experimental import pallas as pl
from jax.experimental.pallas import tpu as pltpu

TEMP_NTXENT = 0.07        # NTXentLoss temperature
EPS = 1e-12               # F.normalize eps


def _supcon_kernel(x_ref, lab_col_ref, lab_row_ref, loss_ref):
    x = x_ref[...].astype(jnp.float32)                        # (N, Dp)
    n = x.shape[0]

    # --- F.normalize(feature_vectors, p=2, dim=1) ---
    # x / max(||x||, eps) == x * rsqrt(max(||x||^2, eps^2))
    xn = x * jax.lax.rsqrt(
        jnp.maximum(jnp.sum(x * x, axis=1, keepdims=True), EPS * EPS))

    # --- logits = xn @ xn.T (outer /0.1 temperature cancels under NTXent row norm) ---
    # bf16 inputs + f32 accumulation; result is re-normalized below, so the cast is benign.
    xn_bf = xn.astype(jnp.bfloat16)
    logits = jax.lax.dot_general(
        xn_bf, xn_bf, (((1,), (1,)), ((), ())),
        preferred_element_type=jnp.float32)                   # (N, N) f32

    # --- NTXentLoss(temperature=0.07)(embeddings=logits, labels) ---
    # CosineSimilarity over rows of `logits`:
    #   sim_ij = (logits_i . logits_j) * r_i * r_j / T,  r_i = rsqrt(||logits_i||^2)
    # logits is symmetric, so its column norms equal its row norms; computing both
    # orientations from the same squared matrix avoids an in-kernel transpose.
    lg2 = logits * logits
    inv_t = jnp.float32(1.0 / TEMP_NTXENT)
    r_col = jax.lax.rsqrt(
        jnp.maximum(jnp.sum(lg2, axis=1, keepdims=True), EPS * EPS)) * inv_t   # (N, 1)
    r_row = jax.lax.rsqrt(
        jnp.maximum(jnp.sum(lg2, axis=0, keepdims=True), EPS * EPS))           # (1, N)

    # bf16 Gram matmul, f32 accumulation; f32 rank-1 scaling applied post-matmul.
    logits_bf = logits.astype(jnp.bfloat16)
    gram = jax.lax.dot_general(
        logits_bf, logits_bf, (((1,), (1,)), ((), ())),
        preferred_element_type=jnp.float32)                   # (N, N)
    sim = gram * r_col * r_row                                # already / temperature

    # --- pair masks ---
    lab_col = lab_col_ref[...]                                # (N, 1) int32
    lab_row = lab_row_ref[...]                                # (1, N) int32
    same = lab_col == lab_row                                 # (N, N)
    pos_mask = jnp.logical_and(
        same,
        jax.lax.broadcasted_iota(jnp.int32, (n, n), 0)
        != jax.lax.broadcasted_iota(jnp.int32, (n, n), 1))    # positives (a != p)
    # negatives == ~same, used inline via where(same, ...) below (never materialized)

    # --- per-anchor max over negatives (single numerically-safe exp) ---
    neg_inf = jnp.float32(-jnp.inf)
    max_neg = jnp.max(jnp.where(same, neg_inf, sim),
                      axis=1, keepdims=True)                  # (N, 1), -inf if no negatives
    row_has_neg = max_neg > neg_inf                           # derived, no extra reduction
    max_neg_safe = jnp.where(row_has_neg, max_neg, 0.0)

    # single N^2 exp; |sim - max_neg_safe| <= ~2/0.07 ~= 28.6, well inside f32 range
    shifted = sim - max_neg_safe                              # (N, N)
    e = jnp.exp(shifted)                                      # (N, N)
    sum_neg = jnp.sum(jnp.where(same, 0.0, e),
                      axis=1, keepdims=True)                  # (N, 1)

    # per positive pair (a, p):
    #   -log(exp(pos) / (exp(pos) + sum_neg(a))) == log(e_pos + sum_neg(a)) - shifted_pos
    # (exact, shift-invariant; rows with no negatives give exactly 0)
    pair_loss = jnp.log(e + sum_neg) - shifted

    # --- MeanReducer over positive-pair losses ---
    n_f = jnp.float32(n)
    n_same = jnp.sum(same.astype(jnp.float32))                # one reduction for both counts
    n_pos = n_same - n_f
    n_neg = n_f * n_f - n_same
    total = jnp.sum(jnp.where(pos_mask, pair_loss, 0.0))
    loss = jnp.where(jnp.logical_and(n_pos > 0, n_neg > 0),
                     total / jnp.maximum(n_pos, 1.0),
                     jnp.float32(0.0))
    loss_ref[0, 0] = loss


def supervised_contrastive_loss(feature_vectors, labels):
    feature_vectors = jnp.asarray(feature_vectors, jnp.float32)
    n, d = feature_vectors.shape

    # Zero-pad the feature dim to a lane multiple (norms and dot products unchanged).
    # Multiples of 256 are marginally better for the v6e/v7x 256-wide MXU.
    dp = max(128, ((d + 127) // 128) * 128)
    if dp != d:
        feature_vectors = jnp.pad(feature_vectors, ((0, 0), (0, dp - d)))
    # TODO(synk): for v5e, ship x as bf16 (or D-chunk the first matmul) to shrink the
    # exposed input DMA of this single-block design.

    labels_sq = jnp.asarray(labels).reshape(-1).astype(jnp.int32)   # torch.squeeze(labels)
    lab_col = labels_sq.reshape(n, 1)
    lab_row = labels_sq.reshape(1, n)

    # Per-generation VMEM budget with ~20% headroom (replaces the fixed 32 MiB cap).
    try:
        vmem_cap = int(pltpu.get_tpu_info().vmem_capacity_bytes)
    except Exception:
        vmem_cap = 64 * 1024 * 1024
    vmem_limit = int(vmem_cap * 0.8)

    # Advisory cost estimate: 2 MXU matmuls (N^2*Dp and N^3 MACs) + elementwise tail.
    cost = pl.CostEstimate(
        flops=2 * n * n * dp + 2 * n * n * n + 10 * n * n,
        transcendentals=2 * n * n + 2 * n,
        bytes_accessed=n * dp * 4 + 2 * n * 4 + 4,
    )

    # Single-block design: x, logits, sim and masks are all live in VMEM at once, so the
    # practical max N is ~1.5-2K on 128 MiB parts (v5e/v6e) and ~1K on v7x (64 MiB).
    # TODO(synk): flash-style gridded restructure (row-parallel with online max/sum-exp,
    # symmetry-halved blocks, dimension_semantics=("parallel","arbitrary")) for larger N
    # and to use both v7x TensorCores.
    out = pl.pallas_call(
        _supcon_kernel,
        out_shape=jax.ShapeDtypeStruct((1, 1), jnp.float32),
        in_specs=[
            pl.BlockSpec(memory_space=pltpu.MemorySpace.VMEM),
            pl.BlockSpec(memory_space=pltpu.MemorySpace.VMEM),
            pl.BlockSpec(memory_space=pltpu.MemorySpace.VMEM),
        ],
        out_specs=pl.BlockSpec(memory_space=pltpu.MemorySpace.SMEM),
        compiler_params=pltpu.CompilerParams(vmem_limit_bytes=vmem_limit),
        cost_estimate=cost,
    )(feature_vectors, lab_col, lab_row)
    return out[0, 0]


if __name__ == "__main__":
    key = jax.random.PRNGKey(0)
    N, D = 8, 32
    feats = jax.random.normal(key, (N, D), dtype=jnp.float32)
    labels = jnp.array([[0], [1], [0], [1], [2], [2], [0], [1]], dtype=jnp.int32)

    loss = supervised_contrastive_loss(feats, labels)
    jax.block_until_ready(loss)
    print("KERNEL_OK")
</pallas_src>

<mosaic_0001>
module attributes {stable_mosaic.version = 11 : i64} {
  func.func @_supcon_kernel(%arg0: memref<8x128xf32, #tpu.memory_space<vmem>>, %arg1: memref<8x1xi32, #tpu.memory_space<vmem>>, %arg2: memref<1x8xi32, #tpu.memory_space<vmem>>, %arg3: memref<1x1xf32, #tpu.memory_space<smem>>) attributes {dimension_semantics = [], scalar_prefetch = 0 : i64, scratch_operands = 0 : i64, tpu.core_type = #tpu.core_type<tc>} {
    %c0 = arith.constant 0 : index
    %c0_0 = arith.constant 0 : index
    %0 = vector.load %arg0[%c0, %c0_0] : memref<8x128xf32, #tpu.memory_space<vmem>>, vector<8x128xf32>
    %1 = arith.mulf %0, %0 : vector<8x128xf32>
    %cst = arith.constant dense<0.000000e+00> : vector<8xf32>
    %2 = vector.multi_reduction <add>, %1, %cst [1] : vector<8x128xf32> to vector<8xf32>
    %3 = vector.shape_cast %2 : vector<8xf32> to vector<8x1xf32>
    %cst_1 = arith.constant 1.000000e-24 : f32
    %4 = vector.broadcast %cst_1 : f32 to vector<8x1xf32>
    %5 = arith.maximumf %3, %4 : vector<8x1xf32>
    %6 = math.rsqrt %5 : vector<8x1xf32>
    %7 = vector.broadcast %6 : vector<8x1xf32> to vector<8x128xf32>
    %8 = arith.mulf %0, %7 : vector<8x128xf32>
    %9 = arith.truncf %8 : vector<8x128xf32> to vector<8x128xbf16>
    %cst_2 = arith.constant dense<0.000000e+00> : vector<8x8xf32>
    %10 = tpu.matmul %9, %9, %cst_2 {dimension_numbers = #tpu.dot_dimension_numbers<[1], [1], [0], [0], [0, 0, 1, 0], [], []>} : vector<8x128xbf16>, vector<8x128xbf16>, vector<8x8xf32> -> vector<8x8xf32>
    %11 = arith.mulf %10, %10 : vector<8x8xf32>
    %cst_3 = arith.constant dense<0.000000e+00> : vector<8xf32>
    %12 = vector.multi_reduction <add>, %11, %cst_3 [1] : vector<8x8xf32> to vector<8xf32>
    %13 = vector.shape_cast %12 : vector<8xf32> to vector<8x1xf32>
    %cst_4 = arith.constant 1.000000e-24 : f32
    %14 = vector.broadcast %cst_4 : f32 to vector<8x1xf32>
    %15 = arith.maximumf %13, %14 : vector<8x1xf32>
    %16 = math.rsqrt %15 : vector<8x1xf32>
    %cst_5 = arith.constant 14.2857141 : f32
    %17 = vector.broadcast %cst_5 : f32 to vector<8x1xf32>
    %18 = arith.mulf %16, %17 : vector<8x1xf32>
    %cst_6 = arith.constant dense<0.000000e+00> : vector<8xf32>
    %19 = vector.multi_reduction <add>, %11, %cst_6 [0] : vector<8x8xf32> to vector<8xf32>
    %20 = vector.shape_cast %19 : vector<8xf32> to vector<1x8xf32>
    %cst_7 = arith.constant 1.000000e-24 : f32
    %21 = vector.broadcast %cst_7 : f32 to vector<1x8xf32>
    %22 = arith.maximumf %20, %21 : vector<1x8xf32>
    %23 = math.rsqrt %22 : vector<1x8xf32>
    %24 = arith.truncf %10 : vector<8x8xf32> to vector<8x8xbf16>
    %cst_8 = arith.constant dense<0.000000e+00> : vector<8x8xf32>
    %25 = tpu.matmul %24, %24, %cst_8 {dimension_numbers = #tpu.dot_dimension_numbers<[1], [1], [0], [0], [0, 0, 1, 0], [], []>} : vector<8x8xbf16>, vector<8x8xbf16>, vector<8x8xf32> -> vector<8x8xf32>
    %26 = vector.broadcast %18 : vector<8x1xf32> to vector<8x8xf32>
    %27 = arith.mulf %25, %26 : vector<8x8xf32>
    %28 = vector.broadcast %23 : vector<1x8xf32> to vector<8x8xf32>
    %29 = arith.mulf %27, %28 : vector<8x8xf32>
    %c0_9 = arith.constant 0 : index
    %c0_10 = arith.constant 0 : index
    %30 = vector.load %arg1[%c0_9, %c0_10] : memref<8x1xi32, #tpu.memory_space<vmem>>, vector<8x1xi32>
    %c0_11 = arith.constant 0 : index
    %c0_12 = arith.constant 0 : index
    %31 = vector.load %arg2[%c0_11, %c0_12] : memref<1x8xi32, #tpu.memory_space<vmem>>, vector<1x8xi32>
    %32 = vector.broadcast %30 : vector<8x1xi32> to vector<8x8xi32>
    %33 = vector.broadcast %31 : vector<1x8xi32> to vector<8x8xi32>
    %34 = arith.cmpi eq, %32, %33 : vector<8x8xi32>
    %35 = tpu.iota {dimensions = array<i32: 0>} : vector<8x8xi32>
    %36 = tpu.iota {dimensions = array<i32: 1>} : vector<8x8xi32>
    %37 = arith.cmpi ne, %35, %36 : vector<8x8xi32>
    %38 = arith.andi %34, %37 : vector<8x8xi1>
    %cst_13 = arith.constant 0xFF800000 : f32
    %39 = vector.broadcast %cst_13 : f32 to vector<8x8xf32>
    %40 = arith.select %34, %39, %29 : vector<8x8xi1>, vector<8x8xf32>
    %cst_14 = arith.constant dense<0xFF800000> : vector<8xf32>
    %41 = vector.multi_reduction <maximumf>, %40, %cst_14 [1] : vector<8x8xf32> to vector<8xf32>
    %42 = vector.shape_cast %41 : vector<8xf32> to vector<8x1xf32>
    %cst_15 = arith.constant 0xFF800000 : f32
    %43 = vector.broadcast %cst_15 : f32 to vector<8x1xf32>
    %44 = arith.cmpf ogt, %42, %43 : vector<8x1xf32>
    %cst_16 = arith.constant 0.000000e+00 : f32
    %45 = vector.broadcast %cst_16 : f32 to vector<8x1xf32>
    %46 = arith.select %44, %42, %45 : vector<8x1xi1>, vector<8x1xf32>
    %47 = vector.broadcast %46 : vector<8x1xf32> to vector<8x8xf32>
    %48 = arith.subf %29, %47 : vector<8x8xf32>
    %49 = math.exp %48 : vector<8x8xf32>
    %cst_17 = arith.constant 0.000000e+00 : f32
    %50 = vector.broadcast %cst_17 : f32 to vector<8x8xf32>
    %51 = arith.select %34, %50, %49 : vector<8x8xi1>, vector<8x8xf32>
    %cst_18 = arith.constant dense<0.000000e+00> : vector<8xf32>
    %52 = vector.multi_reduction <add>, %51, %cst_18 [1] : vector<8x8xf32> to vector<8xf32>
    %53 = vector.shape_cast %52 : vector<8xf32> to vector<8x1xf32>
    %54 = vector.broadcast %53 : vector<8x1xf32> to vector<8x8xf32>
    %55 = arith.addf %49, %54 : vector<8x8xf32>
    %56 = math.log %55 : vector<8x8xf32>
    %57 = arith.subf %56, %48 : vector<8x8xf32>
    %58 = arith.extui %34 : vector<8x8xi1> to vector<8x8xi32>
    %59 = arith.sitofp %58 : vector<8x8xi32> to vector<8x8xf32>
    %60 = vector.shape_cast %59 : vector<8x8xf32> to vector<1x8x8xf32>
    %cst_19 = arith.constant dense<0.000000e+00> : vector<1xf32>
    %61 = vector.multi_reduction <add>, %60, %cst_19 [1, 2] : vector<1x8x8xf32> to vector<1xf32>
    %62 = vector.shape_cast %61 : vector<1xf32> to vector<1x1x1xf32>
    %63 = vector.extract %62[0, 0, 0] : f32 from vector<1x1x1xf32>
    %cst_20 = arith.constant 8.000000e+00 : f32
    %64 = arith.subf %63, %cst_20 : f32
    %cst_21 = arith.constant 8.000000e+00 : f32
    %cst_22 = arith.constant 8.000000e+00 : f32
    %65 = arith.mulf %cst_21, %cst_22 : f32
    %66 = arith.subf %65, %63 : f32
    %cst_23 = arith.constant 0.000000e+00 : f32
    %67 = vector.broadcast %cst_23 : f32 to vector<8x8xf32>
    %68 = arith.select %38, %57, %67 : vector<8x8xi1>, vector<8x8xf32>
    %69 = vector.shape_cast %68 : vector<8x8xf32> to vector<1x8x8xf32>
    %cst_24 = arith.constant dense<0.000000e+00> : vector<1xf32>
    %70 = vector.multi_reduction <add>, %69, %cst_24 [1, 2] : vector<1x8x8xf32> to vector<1xf32>
    %71 = vector.shape_cast %70 : vector<1xf32> to vector<1x1x1xf32>
    %72 = vector.extract %71[0, 0, 0] : f32 from vector<1x1x1xf32>
    %cst_25 = arith.constant 0.000000e+00 : f32
    %73 = arith.cmpf ogt, %64, %cst_25 : f32
    %cst_26 = arith.constant 0.000000e+00 : f32
    %74 = arith.cmpf ogt, %66, %cst_26 : f32
    %75 = arith.andi %73, %74 : i1
    %cst_27 = arith.constant 1.000000e+00 : f32
    %76 = arith.maximumf %64, %cst_27 : f32
    %77 = arith.divf %72, %76 : f32
    %cst_28 = arith.constant 0.000000e+00 : f32
    %78 = arith.select %75, %77, %cst_28 : f32
    %c0_29 = arith.constant 0 : index
    %c0_30 = arith.constant 0 : index
    %79 = memref.load %arg3[%c0_29, %c0_30] : memref<1x1xf32, #tpu.memory_space<smem>>
    memref.store %78, %arg3[%c0_29, %c0_30] : memref<1x1xf32, #tpu.memory_space<smem>>
    return
  }
}

</mosaic_0001>

<llo_original>
// kernel: tpu_custom_call.1
$region0: #{tpu_custom_call.1}
  #allocation0 [shape = 'u32[]', space=smem, size = 0x4, offset = 0x4, fixed_abs, tag = 'smem constant byte address 0x4 - core index']
  #allocation1 [shape = 'u32[144,128]{1,0:T(1,128)}', space=vmem, size = 0x12000, scoped, tag = 'internal scratch']
  %s0 = inlined_call_operand.vmem [shape: f32[8,128], index: 0, kind: input, shape index: {}]
  %s1 = inlined_call_operand.vmem [shape: s32[8,1], index: 1, kind: input, shape index: {}]
  %s2 = inlined_call_operand.vmem [shape: s32[1,8], index: 2, kind: input, shape index: {}]
  %s3 = inlined_call_operand.hbm [shape: f32[1,1], index: 3, kind: output, shape index: {}]
  %s4 = sld [smem:[#allocation0]]
  $region22: #{tpu_custom_call.1} parent=0
    _
  %s6 = ssub.s32 1, %s4
  %s7 = scalar_select 0, %s6, %s4
  $region1: #{tpu_custom_call.1} parent=0
    #allocation2 [shape = 'u8[512]{0}', space=smem, size = 0x200, scoped, tag = 'output window, operand 0, single buffered']
    #allocation3 [shape = 's32[1]{0}', space=sflag, size = 0x4, scoped, tag = 'scoped memory for tpu_custom_call.1']
    %8 = vsyncpa [#allocation3], 0
    // Predicated region
    $region2: #{tpu_custom_call.1} parent=1 // pred_check
      _
    $region3: #{tpu_custom_call.1} parent=1 // pred_check_branch
      %10 = sbr.rel (0) target = $region5
    $region4: #{tpu_custom_call.1} parent=1 // pred_region
      _
    $region5: #{tpu_custom_call.1} parent=1 // pred_fallthru
      _
    // Predicated region
    $region6: #{tpu_custom_call.1} parent=1 // pred_check
      _
    $region7: #{tpu_custom_call.1} parent=1 // pred_check_branch
      %12 = sbr.rel (0) target = $region9
    $region8: #{tpu_custom_call.1} parent=1 // pred_region
      _
    $region9: #{tpu_custom_call.1} parent=1 // pred_fallthru
      _
    // Predicated region
    $region10: #{tpu_custom_call.1} parent=1 // pred_check
      _
    $region11: #{tpu_custom_call.1} parent=1 // pred_check_branch
      %14 = sbr.rel (0) target = $region13
    $region12: #{tpu_custom_call.1} parent=1 // pred_region
      _
    $region13: #{tpu_custom_call.1} parent=1 // pred_fallthru
      _
    %v16 = vld [vmem:[%s0] sm:$0xff]
    %v17 = vmul.f32 %v16, %v16
    %18 = vadd.xlane.f32.xlu0 %v17
    %v19 = vpop.xlane.xlu0 %18
    %v20 = vmax.f32 %v19, 1e-24
    %v21 = vrsqrt.pop %v20
    %v22 = vmul.f32 %v16, %v21
    %v23 = vpack.c.bf16 %v22, %v22
    %24 = vmatprep.subr.bf16.mxu0 0
    %25 = vmatpush1.bf16.xpose.msra.mxu0 %v23
    %26 = vmatprep.subr.bf16.mxu0 0
    %27 = vmatpush1.bf16.xpose.msra.mxu0 0
    %28 = vmatprep.subr.bf16.mxu0 0
    %29 = vmatpush1.bf16.xpose.msra.mxu0 0
    %30 = vmatprep.subr.bf16.mxu0 0
    %31 = vmatpush1.bf16.xpose.msra.mxu0 0
    %32 = vmatprep.subr.bf16.mxu0 0
    %33 = vmatpush1.bf16.xpose.msra.mxu0 0
    %34 = vmatprep.subr.bf16.mxu0 0
    %35 = vmatpush1.bf16.xpose.msra.mxu0 0
    %36 = vmatprep.subr.bf16.mxu0 0
    %37 = vmatpush1.bf16.xpose.msra.mxu0 0
    %38 = vmatprep.subr.bf16.mxu0 0
    %39 = vmatpush1.bf16.xpose.msra.mxu0 0
    %40 = vmatprep.subr.bf16.mxu0 0
    %41 = vmatpush1.bf16.xpose.msra.mxu0 0
    %42 = vmatprep.subr.bf16.mxu0 0
    %43 = vmatpush1.bf16.xpose.msra.mxu0 0
    %44 = vmatprep.subr.bf16.mxu0 0
    %45 = vmatpush1.bf16.xpose.msra.mxu0 0
    %46 = vmatprep.subr.bf16.mxu0 0
    %47 = vmatpush1.bf16.xpose.msra.mxu0 0
    %48 = vmatprep.subr.bf16.mxu0 0
    %49 = vmatpush1.bf16.xpose.msra.mxu0 0
    %50 = vmatprep.subr.bf16.mxu0 0
    %51 = vmatpush1.bf16.xpose.msra.mxu0 0
    %52 = vmatprep.subr.bf16.mxu0 0
    %53 = vmatpush1.bf16.xpose.msra.mxu0 0
    %54 = vmatprep.subr.bf16.mxu0 0
    %55 = vmatpush1.bf16.xpose.msra.mxu0 0
    %56 = vmatprep.mubr.bf16.mxu0 0
    %57 = vmatmul.mubr.bf16.gmra.mrb[0].mxu0 %v23
    %v58 = vpop.f32.mrb[0].mxu0
    %v59 = vadd.f32 0.0, %v58
    %v60 = vpop.f32.mrb[0].mxu0
    %v61 = vpop.f32.mrb[0].mxu0
    %v62 = vpop.f32.mrb[0].mxu0
    %63 = vdwg.mxu0
    %v64 = vmul.f32 %v59, %v59
    %vm65 = vcmask 64512
    %v66 = vsel %vm65, %v64, 0.0
    %67 = vadd.xlane.f32.xlu0 %v66
    %v68 = vpop.xlane.xlu0 %67
    %v69 = vmax.f32 %v68, 1e-24
    %v70 = vrsqrt.pop %v69
    %v71 = vmul.f32 %v70, 14.285714
    %v72 = vrot.slane %v66, 4
    %v73 = vadd.f32 %v66, %v72
    %v74 = vrot.slane %v73, 2
    %v75 = vadd.f32 %v73, %v74
    %v76 = vrot.slane %v75, 1
    %v77 = vadd.f32 %v75, %v76
    %v78 = vmax.f32 %v77, 1e-24
    %v79 = vrsqrt.pop %v78
    %v80 = vpack.c.bf16 %v59, %v59
    %v82 = vsel %vm65, %v80, 0
    %84 = vmatprep.subr.bf16.mxu0 0
    %85 = vmatpush1.bf16.xpose.msra.mxu0 %v82
    %86 = vmatprep.subr.bf16.mxu0 0
    %87 = vmatpush1.bf16.xpose.msra.mxu0 0
    %88 = vmatprep.subr.bf16.mxu0 0
    %89 = vmatpush1.bf16.xpose.msra.mxu0 0
    %90 = vmatprep.subr.bf16.mxu0 0
    %91 = vmatpush1.bf16.xpose.msra.mxu0 0
    %92 = vmatprep.subr.bf16.mxu0 0
    %93 = vmatpush1.bf16.xpose.msra.mxu0 0
    %94 = vmatprep.subr.bf16.mxu0 0
    %95 = vmatpush1.bf16.xpose.msra.mxu0 0
    %96 = vmatprep.subr.bf16.mxu0 0
    %97 = vmatpush1.bf16.xpose.msra.mxu0 0
    %98 = vmatprep.subr.bf16.mxu0 0
    %99 = vmatpush1.bf16.xpose.msra.mxu0 0
    %100 = vmatprep.subr.bf16.mxu0 0
    %101 = vmatpush1.bf16.xpose.msra.mxu0 0
    %102 = vmatprep.subr.bf16.mxu0 0
    %103 = vmatpush1.bf16.xpose.msra.mxu0 0
    %104 = vmatprep.subr.bf16.mxu0 0
    %105 = vmatpush1.bf16.xpose.msra.mxu0 0
    %106 = vmatprep.subr.bf16.mxu0 0
    %107 = vmatpush1.bf16.xpose.msra.mxu0 0
    %108 = vmatprep.subr.bf16.mxu0 0
    %109 = vmatpush1.bf16.xpose.msra.mxu0 0
    %110 = vmatprep.subr.bf16.mxu0 0
    %111 = vmatpush1.bf16.xpose.msra.mxu0 0
    %112 = vmatprep.subr.bf16.mxu0 0
    %113 = vmatpush1.bf16.xpose.msra.mxu0 0
    %114 = vmatprep.subr.bf16.mxu0 0
    %115 = vmatpush1.bf16.xpose.msra.mxu0 0
    %116 = vmatprep.mubr.bf16.mxu0 0
    %117 = vmatmul.mubr.bf16.gmra.mrb[0].mxu0 %v82
    %v118 = vpop.f32.mrb[0].mxu0
    %v119 = vadd.f32 0.0, %v118
    %v120 = vpop.f32.mrb[0].mxu0
    %v121 = vpop.f32.mrb[0].mxu0
    %v122 = vpop.f32.mrb[0].mxu0
    %123 = vdwg.mxu0
    %v124 = vmul.f32 %v119, %v71
    %v125 = vmul.f32 %v124, %v79
    %v126 = vld [vmem:[%s1] sm:$0xff]
    %v127 = vld [vmem:[%s2] sm:$0x1]
    %128 = vset.pattern.permute.xlu0 0
    %129 = vperm.xlu0 %128, %v126
    %v130 = vpop.permute.xlu0 %129
    %v131 = vlaneseq
    %v132 = vshrl.u32 %v131, 7
    %v133 = vsub.s32 0, %v132
    %v134 = vrot.slane %v127, %v133
    %vm135 = vcmp.eq.s32.totalorder %v130, %v134
    %v136 = vlaneseq
    %v137 = vshrl.u32 %v136, 7
    %v138 = vlaneseq
    %v139 = vand.u32 %v138, 127
    %vm140 = vcmp.ne.s32.totalorder %v137, %v139
    %vm141 = vmand %vm135, %vm140
    %v142 = vsel %vm135, -inf, %v125
    %v143 = vsel %vm65, %v142, -inf
    %144 = vmax.xlane.f32.xlu0 %v143
    %v145 = vpop.xlane.xlu0 %144
    %vm146 = vcmp.gt.f32.partialorder %v145, -inf
    %v147 = vsel %vm146, %v145, 0.0
    %v148 = vsub.f32 %v125, %v147
    %v149 = vmul.f32 %v148, 1.442695
    %v150 = vpow.pop %v149
    %v151 = vsel %vm135, 0.0, %v150
    %v152 = vsel %vm65, %v151, 0.0
    %153 = vadd.xlane.f32.xlu0 %v152
    %v154 = vpop.xlane.xlu0 %153
    %v155 = vadd.f32 %v150, %v154
    %v156 = vlog2.pop %v155
    %v157 = vmul.f32 %v156, 0.6931472
    %v158 = vsub.f32 %v157, %v148
    %v159 = vsel %vm135, 1, 0
    %v160 = vcvt.s32.f32 %v159
    %v161 = vsel %vm65, %v160, 0.0
    %162 = vadd.xlane.f32.xlu0 %v161
    %v163 = vpop.xlane.xlu0 %162
    %v164 = vrot.slane %v163, 4
    %v165 = vadd.f32 %v163, %v164
    %v166 = vrot.slane %v165, 2
    %v167 = vadd.f32 %v165, %v166
    %v168 = vrot.slane %v167, 1
    %v169 = vadd.f32 %v167, %v168
    %s170 = vtos %v169
    %s171 = ssub.f32 %s170, 8.0
    %s172 = ssub.f32 64.0, %s170
    %v173 = vsel %vm141, %v158, 0.0
    %v174 = vsel %vm65, %v173, 0.0
    %175 = vadd.xlane.f32.xlu0 %v174
    %v176 = vpop.xlane.xlu0 %175
    %v177 = vrot.slane %v176, 4
    %v178 = vadd.f32 %v176, %v177
    %v179 = vrot.slane %v178, 2
    %v180 = vadd.f32 %v178, %v179
    %v181 = vrot.slane %v180, 1
    %v182 = vadd.f32 %v180, %v181
    %s183 = vtos %v182
    %p184 = scmp.gt.f32.partialorder %s171, 0.0
    %p185 = scmp.gt.f32.partialorder %s172, 0.0
    %p186 = pnand %p184, %p185
    %p187 = pneg %p186
    %s188 = smax.f32 %s171, 1.0
    %v189 = vstv %s188
    %v190 = vrcp.pop %v189
    %s191 = vtos %v190
    %s192 = smul.f32 %s183, %s191
    %s193 = scalar_select %p187, %s192, 0.0
    %s194 = scalar_lea.smem [#allocation2], 0
    %195 = sst [smem:[%s194]] %s193
    // Predicated region
    $region14: #{tpu_custom_call.1} parent=1 // pred_check
      _
    $region15: #{tpu_custom_call.1} parent=1 // pred_check_branch
      %197 = sbr.rel (0) target = $region17
    $region16: #{tpu_custom_call.1} parent=1 // pred_region
      %s199 = ssub.s32 16, 16
      %200 = vsyncadd [#allocation3], %s199
      %203 = dma.smem_to_hbm [#allocation2], 16, %s3, [#allocation3]
    $region17: #{tpu_custom_call.1} parent=1 // pred_fallthru
      _
    // Predicated region
    $region18: #{tpu_custom_call.1} parent=1 // pred_check
      _
    $region19: #{tpu_custom_call.1} parent=1 // pred_check_branch
      %205 = sbr.rel (0) target = $region21
    $region20: #{tpu_custom_call.1} parent=1 // pred_region
      %206 = dma.done [#allocation3], 16
    $region21: #{tpu_custom_call.1} parent=1 // pred_fallthru
      _
    %207 = sfence
    %208 = vsyncpa [#allocation3], 1

</llo_original>
